<compile_context>
chip_gen: v7x
topology: tpu7x:2x2x1
jax: 0.10.0
libtpu: 0.0.40
codegen_flags: <defaults>
</compile_context>

<pallas_src>
import functools

import jax
import jax.numpy as jnp
from jax.experimental import pallas as pl
from jax.experimental.pallas import tpu as pltpu

GAMMA = 2                       # module default
ALPHA = (0.2, 0.3, 0.5)         # module default


def _round_up(x, m):
    return ((x + m - 1) // m) * m


def _focal_loss_kernel(pred_ref, tgt_ref, out_ref, acc_ref, *,
                       alpha, gamma, n_valid, blocks_per_core):
    # pred_ref : (C, BR, 128) input-dtype VMEM (classes on leading axis,
    #            batch split into BR sublane-rows x 128 lanes)
    # tgt_ref  : (BR, 128) i32 VMEM
    # out_ref  : (1, 8, 128) f32 VMEM  (per-core partial sums, written once)
    # acc_ref  : (8, 128)    f32 VMEM scratch (resident accumulator)
    num_classes, br, _ = pred_ref.shape
    step = pl.program_id(1)
    nsteps = pl.num_programs(1)

    @pl.when(step == 0)
    def _():
        acc_ref[...] = jnp.zeros_like(acc_ref)

    # Unrolled, numerically-stable log-softmax over the tiny static class axis.
    logits = [pred_ref[k].astype(jnp.float32) for k in range(num_classes)]
    m = logits[0]
    for k in range(1, num_classes):
        m = jnp.maximum(m, logits[k])
    shifted = [x - m for x in logits]
    exps = [jnp.exp(s) for s in shifted]
    denom = exps[0]
    for k in range(1, num_classes):
        denom = denom + exps[k]
    lse = jnp.log(denom)
    log_sm = [s - lse for s in shifted]          # C x (BR, 128)

    # "Gather" logpt / alpha_t at the target class via a short select chain.
    tgt = tgt_ref[...]
    logpt = log_sm[num_classes - 1]
    alpha_t = jnp.full(logpt.shape, alpha[num_classes - 1], dtype=jnp.float32)
    for k in range(num_classes - 2, -1, -1):
        sel = tgt == k
        logpt = jnp.where(sel, log_sm[k], logpt)
        alpha_t = jnp.where(sel, alpha[k], alpha_t)

    pt = jnp.exp(logpt)
    one_minus_pt = 1.0 - pt
    if gamma == 2:
        mod = one_minus_pt * one_minus_pt        # explicit square, no pow
    else:
        mod = one_minus_pt ** gamma              # static python exponent
    focal = alpha_t * mod * (-logpt)             # ce_loss = -logpt, (BR, 128)

    # Logical (unclamped) block index -> global batch offsets for tail masking.
    blk = pl.program_id(0) * blocks_per_core + step
    row0 = blk * br
    may_overrun = (row0 + br) * 128 > n_valid    # ragged tail or phantom block

    @pl.when(jnp.logical_not(may_overrun))
    def _():  # steady state: no iota / compare / select
        acc_ref[...] += jnp.sum(focal.reshape(br // 8, 8, 128), axis=0)

    @pl.when(may_overrun)
    def _():  # mask lanes past the true batch size (garbage / padding -> 0)
        r = jax.lax.broadcasted_iota(jnp.int32, (br, 128), 0)
        l = jax.lax.broadcasted_iota(jnp.int32, (br, 128), 1)
        gidx = (row0 + r) * 128 + l
        masked = jnp.where(gidx < n_valid, focal, 0.0)
        acc_ref[...] += jnp.sum(masked.reshape(br // 8, 8, 128), axis=0)

    @pl.when(step == nsteps - 1)
    def _():
        out_ref[...] = acc_ref[...].reshape(out_ref.shape)


def multi_class_focal_loss(pred, target, alpha=ALPHA, gamma=GAMMA,
                           reduction="mean", *, block_rows=2048, num_cores=2):
    """pred: (N, C) float logits; target: (N,) int class ids. Scalar focal loss."""
    n, num_classes = pred.shape
    alpha = tuple(float(a) for a in alpha)
    assert len(alpha) == num_classes

    # Lane-dense layout: (C, N) -> (C, R, 128).  Batch is padded only up to the
    # next multiple of 8*128 (tiny); under jit the transpose + pad + reshape
    # fuse into a single copy.
    # TODO(synk): ideally the logits producer emits the (C, N) layout directly
    # so this transpose copy disappears entirely.
    r_rows = _round_up(pl.cdiv(n, 128), 8)
    n_pad = r_rows * 128
    pred_t = pred.T                              # (C, N), keep input dtype (bf16 ok)
    tgt = target.astype(jnp.int32)
    if n_pad != n:
        pred_t = jnp.pad(pred_t, ((0, 0), (0, n_pad - n)))
        tgt = jnp.pad(tgt, (0, n_pad - n))
    pred3 = pred_t.reshape(num_classes, r_rows, 128)   # free reshape of (C, N)
    tgt2 = tgt.reshape(r_rows, 128)

    br = max(8, min(block_rows, r_rows) // 8 * 8)      # rows per grid step
    blocks_total = pl.cdiv(r_rows, br)
    blocks_per_core = pl.cdiv(blocks_total, num_cores)

    def block_index(core, step):
        # Clamp phantom blocks (when blocks_total % num_cores != 0) to a real
        # block; their contribution is fully masked inside the kernel.
        return jnp.minimum(core * blocks_per_core + step, blocks_total - 1)

    partials = pl.pallas_call(
        functools.partial(_focal_loss_kernel, alpha=alpha, gamma=gamma,
                          n_valid=n, blocks_per_core=blocks_per_core),
        out_shape=jax.ShapeDtypeStruct((num_cores, 8, 128), jnp.float32),
        grid_spec=pltpu.PrefetchScalarGridSpec(
            num_scalar_prefetch=0,
            grid=(num_cores, blocks_per_core),
            in_specs=[
                pl.BlockSpec((num_classes, br, 128),
                             lambda c, i: (0, block_index(c, i), 0)),
                pl.BlockSpec((br, 128),
                             lambda c, i: (block_index(c, i), 0)),
            ],
            out_specs=pl.BlockSpec((1, 8, 128), lambda c, i: (c, 0, 0)),
            scratch_shapes=[pltpu.VMEM((8, 128), jnp.float32)],
        ),
        compiler_params=pltpu.CompilerParams(
            dimension_semantics=("parallel", "arbitrary"),
        ),
    )(pred3, tgt2)

    total = jnp.sum(partials)
    if reduction == "mean":
        return total / n
    if reduction == "sum":
        return total
    # TODO(synk): reduction='none' (per-element focal loss output) is not
    # implemented in this fused-reduction kernel.
    raise NotImplementedError("reduction must be 'mean' or 'sum'")


def _reference(pred, target, alpha, gamma=GAMMA):
    # Pure-JAX reference mirroring the PyTorch forward (reduction='mean').
    alpha = jnp.asarray(alpha, dtype=jnp.float32)
    log_sm = jax.nn.log_softmax(pred.astype(jnp.float32), axis=1)
    logpt = jnp.take_along_axis(log_sm, target.reshape(-1, 1), axis=1).reshape(-1)
    alpha_t = alpha[target]
    pt = jnp.exp(logpt)
    return jnp.mean(alpha_t * (1.0 - pt) ** gamma * (-logpt))


if __name__ == "__main__":
    key = jax.random.PRNGKey(0)
    k1, k2, k3, k4 = jax.random.split(key, 4)
    num_classes = len(ALPHA)   # 3 classes, matching alpha=[0.2, 0.3, 0.5]

    # Small shape implied by the module: a batch of logits over 3 classes.
    n1 = 8
    pred1 = jax.random.normal(k1, (n1, num_classes), dtype=jnp.float32)
    target1 = jax.random.randint(k2, (n1,), 0, num_classes, dtype=jnp.int32)
    loss_fn1 = jax.jit(lambda p, t: multi_class_focal_loss(p, t))
    loss1 = loss_fn1(pred1, target1)
    jax.block_until_ready(loss1)
    ref1 = _reference(pred1, target1, ALPHA)
    assert jnp.allclose(loss1, ref1, rtol=1e-5, atol=1e-6), (loss1, ref1)

    # Exercise multi-step accumulation, the ragged-tail mask and the
    # phantom-block path of the 2-way core split (blocks_total=3 with tiny blocks).
    n2 = 3000
    pred2 = jax.random.normal(k3, (n2, num_classes), dtype=jnp.float32)
    target2 = jax.random.randint(k4, (n2,), 0, num_classes, dtype=jnp.int32)
    loss_fn2 = jax.jit(lambda p, t: multi_class_focal_loss(p, t, block_rows=8))
    loss2 = loss_fn2(pred2, target2)
    jax.block_until_ready(loss2)
    ref2 = _reference(pred2, target2, ALPHA)
    assert jnp.allclose(loss2, ref2, rtol=1e-5, atol=1e-6), (loss2, ref2)

    print("KERNEL_OK")
</pallas_src>

<mosaic_0001>
module attributes {stable_mosaic.version = 11 : i64} {
  func.func @_focal_loss_kernel(%arg0: i32, %arg1: i32, %arg2: memref<3x8x128xf32, #tpu.memory_space<vmem>>, %arg3: memref<8x128xi32, #tpu.memory_space<vmem>>, %arg4: memref<1x8x128xf32, #tpu.memory_space<vmem>>, %arg5: memref<8x128xf32, #tpu.memory_space<vmem>>) attributes {dimension_semantics = [#tpu.dimension_semantics<parallel>, #tpu.dimension_semantics<arbitrary>], iteration_bounds = array<i64: 2, 1>, scalar_prefetch = 0 : i64, scratch_operands = 1 : i64, tpu.core_type = #tpu.core_type<tc>, window_params = [{transform_indices = @transform_0, window_bounds = array<i64: 3, 8, 128>}, {transform_indices = @transform_1, window_bounds = array<i64: 8, 128>}, {transform_indices = @transform_2, window_bounds = array<i64: 1, 8, 128>}]} {
    %c0_i32 = arith.constant 0 : i32
    %0 = arith.cmpi eq, %arg1, %c0_i32 : i32
    %1 = arith.extui %0 : i1 to i32
    %c0_i32_0 = arith.constant 0 : i32
    %2 = arith.cmpi ne, %1, %c0_i32_0 : i32
    scf.if %2 {
      %cst_21 = arith.constant 0.000000e+00 : f32
      %57 = vector.broadcast %cst_21 : f32 to vector<8x128xf32>
      %c0_22 = arith.constant 0 : index
      %c0_23 = arith.constant 0 : index
      %58 = vector.load %arg5[%c0_22, %c0_23] : memref<8x128xf32, #tpu.memory_space<vmem>>, vector<8x128xf32>
      tpu.vector_store %arg5[%c0_22, %c0_23], %57 {strides = array<i32>} : memref<8x128xf32, #tpu.memory_space<vmem>>, vector<8x128xf32>,
    } else {
    }
    %c0 = arith.constant 0 : index
    %c0_1 = arith.constant 0 : index
    %c0_2 = arith.constant 0 : index
    %3 = vector.load %arg2[%c0, %c0_1, %c0_2] : memref<3x8x128xf32, #tpu.memory_space<vmem>>, vector<1x8x128xf32>
    %4 = vector.shape_cast %3 : vector<1x8x128xf32> to vector<8x128xf32>
    %c1 = arith.constant 1 : index
    %c0_3 = arith.constant 0 : index
    %c0_4 = arith.constant 0 : index
    %5 = vector.load %arg2[%c1, %c0_3, %c0_4] : memref<3x8x128xf32, #tpu.memory_space<vmem>>, vector<1x8x128xf32>
    %6 = vector.shape_cast %5 : vector<1x8x128xf32> to vector<8x128xf32>
    %c2 = arith.constant 2 : index
    %c0_5 = arith.constant 0 : index
    %c0_6 = arith.constant 0 : index
    %7 = vector.load %arg2[%c2, %c0_5, %c0_6] : memref<3x8x128xf32, #tpu.memory_space<vmem>>, vector<1x8x128xf32>
    %8 = vector.shape_cast %7 : vector<1x8x128xf32> to vector<8x128xf32>
    %9 = arith.maximumf %4, %6 : vector<8x128xf32>
    %10 = arith.maximumf %9, %8 : vector<8x128xf32>
    %11 = arith.subf %4, %10 : vector<8x128xf32>
    %12 = arith.subf %6, %10 : vector<8x128xf32>
    %13 = arith.subf %8, %10 : vector<8x128xf32>
    %14 = math.exp %11 : vector<8x128xf32>
    %15 = math.exp %12 : vector<8x128xf32>
    %16 = math.exp %13 : vector<8x128xf32>
    %17 = arith.addf %14, %15 : vector<8x128xf32>
    %18 = arith.addf %17, %16 : vector<8x128xf32>
    %19 = math.log %18 : vector<8x128xf32>
    %20 = arith.subf %11, %19 : vector<8x128xf32>
    %21 = arith.subf %12, %19 : vector<8x128xf32>
    %22 = arith.subf %13, %19 : vector<8x128xf32>
    %c0_7 = arith.constant 0 : index
    %c0_8 = arith.constant 0 : index
    %23 = vector.load %arg3[%c0_7, %c0_8] : memref<8x128xi32, #tpu.memory_space<vmem>>, vector<8x128xi32>
    %cst = arith.constant 5.000000e-01 : f32
    %24 = vector.broadcast %cst : f32 to vector<8x128xf32>
    %c1_i32 = arith.constant 1 : i32
    %25 = vector.broadcast %c1_i32 : i32 to vector<8x128xi32>
    %26 = arith.cmpi eq, %23, %25 : vector<8x128xi32>
    %27 = arith.select %26, %21, %22 : vector<8x128xi1>, vector<8x128xf32>
    %cst_9 = arith.constant 3.000000e-01 : f32
    %28 = vector.broadcast %cst_9 : f32 to vector<8x128xf32>
    %29 = arith.select %26, %28, %24 : vector<8x128xi1>, vector<8x128xf32>
    %c0_i32_10 = arith.constant 0 : i32
    %30 = vector.broadcast %c0_i32_10 : i32 to vector<8x128xi32>
    %31 = arith.cmpi eq, %23, %30 : vector<8x128xi32>
    %32 = arith.select %31, %20, %27 : vector<8x128xi1>, vector<8x128xf32>
    %cst_11 = arith.constant 2.000000e-01 : f32
    %33 = vector.broadcast %cst_11 : f32 to vector<8x128xf32>
    %34 = arith.select %31, %33, %29 : vector<8x128xi1>, vector<8x128xf32>
    %35 = math.exp %32 : vector<8x128xf32>
    %cst_12 = arith.constant 1.000000e+00 : f32
    %36 = vector.broadcast %cst_12 : f32 to vector<8x128xf32>
    %37 = arith.subf %36, %35 : vector<8x128xf32>
    %38 = arith.mulf %37, %37 : vector<8x128xf32>
    %39 = arith.mulf %34, %38 : vector<8x128xf32>
    %cst_13 = arith.constant 0.000000e+00 : f32
    %40 = vector.broadcast %cst_13 : f32 to vector<8x128xf32>
    %41 = arith.subf %40, %32 : vector<8x128xf32>
    %42 = arith.mulf %39, %41 : vector<8x128xf32>
    %c1_i32_14 = arith.constant 1 : i32
    %43 = arith.muli %arg0, %c1_i32_14 : i32
    %44 = arith.addi %43, %arg1 : i32
    %c8_i32 = arith.constant 8 : i32
    %45 = arith.muli %44, %c8_i32 : i32
    %c8_i32_15 = arith.constant 8 : i32
    %46 = arith.addi %45, %c8_i32_15 : i32
    %c128_i32 = arith.constant 128 : i32
    %47 = arith.muli %46, %c128_i32 : i32
    %c8_i32_16 = arith.constant 8 : i32
    %48 = arith.cmpi sgt, %47, %c8_i32_16 : i32
    %true = arith.constant true
    %49 = arith.xori %48, %true : i1
    %50 = arith.extui %49 : i1 to i32
    %c0_i32_17 = arith.constant 0 : i32
    %51 = arith.cmpi ne, %50, %c0_i32_17 : i32
    scf.if %51 {
      %c0_21 = arith.constant 0 : index
      %c0_22 = arith.constant 0 : index
      %57 = vector.load %arg5[%c0_21, %c0_22] : memref<8x128xf32, #tpu.memory_space<vmem>>, vector<8x128xf32>
      %58 = vector.shape_cast %42 : vector<8x128xf32> to vector<1x8x128xf32>
      %cst_23 = arith.constant dense<0.000000e+00> : vector<8x128xf32>
      %59 = vector.multi_reduction <add>, %58, %cst_23 [0] : vector<1x8x128xf32> to vector<8x128xf32>
      %60 = arith.addf %57, %59 : vector<8x128xf32>
      %c0_24 = arith.constant 0 : index
      %c0_25 = arith.constant 0 : index
      %61 = vector.load %arg5[%c0_24, %c0_25] : memref<8x128xf32, #tpu.memory_space<vmem>>, vector<8x128xf32>
      tpu.vector_store %arg5[%c0_24, %c0_25], %60 {strides = array<i32>} : memref<8x128xf32, #tpu.memory_space<vmem>>, vector<8x128xf32>,
    } else {
    }
    %52 = arith.extui %48 : i1 to i32
    %c0_i32_18 = arith.constant 0 : i32
    %53 = arith.cmpi ne, %52, %c0_i32_18 : i32
    scf.if %53 {
      %57 = tpu.iota {dimensions = array<i32: 0>} : vector<8x128xi32>
      %58 = tpu.iota {dimensions = array<i32: 1>} : vector<8x128xi32>
      %59 = vector.broadcast %45 : i32 to vector<8x128xi32>
      %60 = arith.addi %59, %57 : vector<8x128xi32>
      %c128_i32_21 = arith.constant 128 : i32
      %61 = vector.broadcast %c128_i32_21 : i32 to vector<8x128xi32>
      %62 = arith.muli %60, %61 : vector<8x128xi32>
      %63 = arith.addi %62, %58 : vector<8x128xi32>
      %c8_i32_22 = arith.constant 8 : i32
      %64 = vector.broadcast %c8_i32_22 : i32 to vector<8x128xi32>
      %65 = arith.cmpi slt, %63, %64 : vector<8x128xi32>
      %cst_23 = arith.constant 0.000000e+00 : f32
      %66 = vector.broadcast %cst_23 : f32 to vector<8x128xf32>
      %67 = arith.select %65, %42, %66 : vector<8x128xi1>, vector<8x128xf32>
      %c0_24 = arith.constant 0 : index
      %c0_25 = arith.constant 0 : index
      %68 = vector.load %arg5[%c0_24, %c0_25] : memref<8x128xf32, #tpu.memory_space<vmem>>, vector<8x128xf32>
      %69 = vector.shape_cast %67 : vector<8x128xf32> to vector<1x8x128xf32>
      %cst_26 = arith.constant dense<0.000000e+00> : vector<8x128xf32>
      %70 = vector.multi_reduction <add>, %69, %cst_26 [0] : vector<1x8x128xf32> to vector<8x128xf32>
      %71 = arith.addf %68, %70 : vector<8x128xf32>
      %c0_27 = arith.constant 0 : index
      %c0_28 = arith.constant 0 : index
      %72 = vector.load %arg5[%c0_27, %c0_28] : memref<8x128xf32, #tpu.memory_space<vmem>>, vector<8x128xf32>
      tpu.vector_store %arg5[%c0_27, %c0_28], %71 {strides = array<i32>} : memref<8x128xf32, #tpu.memory_space<vmem>>, vector<8x128xf32>,
    } else {
    }
    %c0_i32_19 = arith.constant 0 : i32
    %54 = arith.cmpi eq, %arg1, %c0_i32_19 : i32
    %55 = arith.extui %54 : i1 to i32
    %c0_i32_20 = arith.constant 0 : i32
    %56 = arith.cmpi ne, %55, %c0_i32_20 : i32
    scf.if %56 {
      %c0_21 = arith.constant 0 : index
      %c0_22 = arith.constant 0 : index
      %57 = vector.load %arg5[%c0_21, %c0_22] : memref<8x128xf32, #tpu.memory_space<vmem>>, vector<8x128xf32>
      %58 = vector.shape_cast %57 : vector<8x128xf32> to vector<1x8x128xf32>
      %c0_23 = arith.constant 0 : index
      %c0_24 = arith.constant 0 : index
      %c0_25 = arith.constant 0 : index
      %59 = vector.load %arg4[%c0_23, %c0_24, %c0_25] : memref<1x8x128xf32, #tpu.memory_space<vmem>>, vector<1x8x128xf32>
      tpu.vector_store %arg4[%c0_23, %c0_24, %c0_25], %58 {strides = array<i32>} : memref<1x8x128xf32, #tpu.memory_space<vmem>>, vector<1x8x128xf32>,
    } else {
    }
    return
  }
  func.func @transform_0(%arg0: i32, %arg1: i32) -> (i32, i32, i32) {
    %c1_i32 = arith.constant 1 : i32
    %0 = arith.muli %arg0, %c1_i32 : i32
    %1 = arith.addi %0, %arg1 : i32
    %c0_i32 = arith.constant 0 : i32
    %2 = arith.minsi %1, %c0_i32 : i32
    %c0_i32_0 = arith.constant 0 : i32
    %c0_i32_1 = arith.constant 0 : i32
    %c0_i32_2 = arith.constant 0 : i32
    return %c0_i32_0, %2, %c0_i32_1 : i32, i32, i32
  }
  func.func @transform_1(%arg0: i32, %arg1: i32) -> (i32, i32) {
    %c1_i32 = arith.constant 1 : i32
    %0 = arith.muli %arg0, %c1_i32 : i32
    %1 = arith.addi %0, %arg1 : i32
    %c0_i32 = arith.constant 0 : i32
    %2 = arith.minsi %1, %c0_i32 : i32
    %c0_i32_0 = arith.constant 0 : i32
    %c0_i32_1 = arith.constant 0 : i32
    return %2, %c0_i32_0 : i32, i32
  }
  func.func @transform_2(%arg0: i32, %arg1: i32) -> (i32, i32, i32) {
    %c0_i32 = arith.constant 0 : i32
    %c0_i32_0 = arith.constant 0 : i32
    %c0_i32_1 = arith.constant 0 : i32
    return %arg0, %c0_i32, %c0_i32_0 : i32, i32, i32
  }
}

</mosaic_0001>

<llo_original>
// kernel: _lambda_.1
$region0: #{_lambda_.1}
  #allocation0 [shape = 'u32[]', space=smem, size = 0x4, offset = 0x4, fixed_abs, tag = 'smem constant byte address 0x4 - core index']
  #allocation1 [shape = 'u32[144,128]{1,0:T(1,128)}', space=vmem, size = 0x12000, scoped, tag = 'internal scratch']
  #allocation2 [shape = 'f32[8,128]{1,0:T(8,128)}', space=vmem, size = 0x1000, scoped, tag = 'scratch operand']
  %s0 = inlined_call_operand.vmem [shape: f32[3,8,128], index: 0, kind: input, shape index: {}]
  %s1 = inlined_call_operand.vmem [shape: s32[8,128], index: 1, kind: input, shape index: {}]
  %s2 = inlined_call_operand.vmem [shape: f32[2,8,128], index: 2, kind: output, shape index: {}]
  %s3 = sld [smem:[#allocation0]]
  $region57: #{_lambda_.1} parent=0
    _
  %s5 = ssub.s32 1, %s3
  %s6 = scalar_select 0, %s5, %s3
  loop: start=0, step=1, limit=4
  $region2: #{_lambda_.1} parent=0 // loop_pre_header
    _
  $region3: #{_lambda_.1} parent=0 // loop_header
    %s8 = sphi 0, %s12
    %p9 = scmp.ge.s32.totalorder %s8, 4
    %s15 = sphi 0, %s27
    %s16 = sphi 0, %s23
    %s17 = sphi 0, %s15
    %s18 = sphi 0, %s16
    %s19 = sphi 0, %s17
    %s20 = sphi 0, %s18
    %s36 = sphi 0, %s38
    %s39 = sphi 0, %s36
    %s40 = sphi 0, %s39
    %s56 = sphi 0, %s40
    %s68 = sphi 0, %s70
    %s71 = sphi 0, %s68
    %s72 = sphi 0, %s71
    %s88 = sphi 0, %s72
    %s94 = sphi 0, %s96
    %s97 = sphi 0, %s94
    %s98 = sphi 0, %s97
    %s114 = sphi 0, %s98
  $region4: #{_lambda_.1} parent=0 // loop_header_branch
    %11 = sbr.rel (%p9) target = $region8
  $region5: #{_lambda_.1} parent=0 // loop_body
    %s13 = ssub.s32 %s8, 1
    %s14 = ssub.s32 %s8, 2
    %s21 = sadd.s32 1, %s16
    %p22 = scmp.ge.s32.totalorder %s21, 1
    %s23 = scalar_select %p22, 0, %s21
    %s24 = sadd.s32 1, %s15
    %s25 = scalar_select %p22, %s24, %s15
    %p26 = scmp.ge.s32.totalorder %s25, 2
    %s27 = scalar_select %p26, 0, %s25
    %s28 = sadd.s32 %s15, %s16
    %p29 = scmp.lt.s32.totalorder %s28, 0
    %s30 = scalar_select %p29, %s28, 0
    %s31 = sadd.s32 %s27, %s23
    %p32 = scmp.lt.s32.totalorder %s31, 0
    %s33 = scalar_select %p32, %s31, 0
    %s34 = ssub.s32 %s30, %s33
    %p35 = scmp.eq.s32.totalorder %s34, 0
    %s37 = sadd.s32 %s36, 1
    %s38 = scalar_select %p35, %s36, %s37
    %p41 = pneg %p35
    %p42 = scmp.eq.s32.totalorder %s8, 1
    %p43 = por %p41, %p42
    %p44 = scmp.ne.s32.totalorder %s36, %s39
    %p45 = scmp.eq.s32.totalorder %s8, 0
    %p46 = por %p44, %p45
    %p47 = scmp.ne.s32.totalorder %s36, %s39
    %p48 = scmp.eq.s32.totalorder %s13, 1
    %p49 = por %p47, %p48
    %p50 = scmp.ne.s32.totalorder %s39, %s40
    %p51 = scmp.eq.s32.totalorder %s13, 0
    %p52 = por %p50, %p51
    %p53 = scmp.ne.s32.totalorder %s39, %s40
    %p54 = scmp.eq.s32.totalorder %s14, 1
    %p55 = por %p53, %p54
    %p57 = scmp.ne.s32.totalorder %s40, %s56
    %p58 = scmp.eq.s32.totalorder %s14, 0
    %p59 = por %p57, %p58
    %s60 = sadd.s32 %s15, %s16
    %p61 = scmp.lt.s32.totalorder %s60, 0
    %s62 = scalar_select %p61, %s60, 0
    %s63 = sadd.s32 %s27, %s23
    %p64 = scmp.lt.s32.totalorder %s63, 0
    %s65 = scalar_select %p64, %s63, 0
    %s66 = ssub.s32 %s62, %s65
    %p67 = scmp.eq.s32.totalorder %s66, 0
    %s69 = sadd.s32 %s68, 1
    %s70 = scalar_select %p67, %s68, %s69
    %p73 = pneg %p67
    %p74 = scmp.eq.s32.totalorder %s8, 1
    %p75 = por %p73, %p74
    %p76 = scmp.ne.s32.totalorder %s68, %s71
    %p77 = scmp.eq.s32.totalorder %s8, 0
    %p78 = por %p76, %p77
    %p79 = scmp.ne.s32.totalorder %s68, %s71
    %p80 = scmp.eq.s32.totalorder %s13, 1
    %p81 = por %p79, %p80
    %p82 = scmp.ne.s32.totalorder %s71, %s72
    %p83 = scmp.eq.s32.totalorder %s13, 0
    %p84 = por %p82, %p83
    %p85 = scmp.ne.s32.totalorder %s71, %s72
    %p86 = scmp.eq.s32.totalorder %s14, 1
    %p87 = por %p85, %p86
    %p89 = scmp.ne.s32.totalorder %s72, %s88
    %p90 = scmp.eq.s32.totalorder %s14, 0
    %p91 = por %p89, %p90
    %s92 = ssub.s32 %s15, %s27
    %p93 = scmp.eq.s32.totalorder %s92, 0
    %s95 = sadd.s32 %s94, 1
    %s96 = scalar_select %p93, %s94, %s95
    %p99 = pneg %p93
    %p100 = scmp.eq.s32.totalorder %s8, 1
    %p101 = por %p99, %p100
    %p102 = scmp.ne.s32.totalorder %s94, %s97
    %p103 = scmp.eq.s32.totalorder %s8, 0
    %p104 = por %p102, %p103
    %p105 = scmp.ne.s32.totalorder %s94, %s97
    %p106 = scmp.eq.s32.totalorder %s13, 1
    %p107 = por %p105, %p106
    %p108 = scmp.ne.s32.totalorder %s97, %s98
    %p109 = scmp.eq.s32.totalorder %s13, 0
    %p110 = por %p108, %p109
    %p111 = scmp.ne.s32.totalorder %s97, %s98
    %p112 = scmp.eq.s32.totalorder %s14, 1
    %p113 = por %p111, %p112
    %p115 = scmp.ne.s32.totalorder %s98, %s114
    %p116 = scmp.eq.s32.totalorder %s14, 0
    %p117 = por %p115, %p116
    %p118 = scmp.le.s32.totalorder 1, %s8
    %p119 = scmp.lt.s32.totalorder %s8, 3
    %p120 = pnand %p118, %p119
    %p121 = pneg %p120
    // Predicated region
    $region9: #{_lambda_.1} parent=5 // pred_check
      _
    $region10: #{_lambda_.1} parent=5 // pred_check_branch
      %123 = sbr.rel (%p120) target = $region12
    $region11: #{_lambda_.1} parent=5 // pred_region
      %s124 = ssub.s32 %s8, 1
    $region12: #{_lambda_.1} parent=5 // pred_fallthru
      _
    %p125 = scmp.lt.s32.totalorder %s8, 2
    // Predicated region
    $region13: #{_lambda_.1} parent=5 // pred_check
      %p126 = pneg %p125
    $region14: #{_lambda_.1} parent=5 // pred_check_branch
      %128 = sbr.rel (%p126) target = $region16
    $region15: #{_lambda_.1} parent=5 // pred_region
      // Predicated region
      $region17: #{_lambda_.1} parent=15 // pred_check
        %p129 = pneg %p46
      $region18: #{_lambda_.1} parent=15 // pred_check_branch
        %131 = sbr.rel (%p129) target = $region20
      $region19: #{_lambda_.1} parent=15 // pred_region
        %s132 = sadd.s32 %s15, %s16
        %p133 = scmp.lt.s32.totalorder %s132, 0
        %s134 = scalar_select %p133, %s132, 0
        %p135 = scmp.lt.s32.totalorder %s134, 0
        %s136 = scalar_select %p135, %s134, 0
        %s137 = smul.addr %s136, 8
        %s138 = scalar_lea.vmem %s0, %s137
        %s139 = sadd.s32 %s15, %s16
        %p140 = scmp.lt.s32.totalorder %s139, 0
        %s141 = scalar_select %p140, %s139, 0
      $region20: #{_lambda_.1} parent=15 // pred_fallthru
        _
      // Predicated region
      $region21: #{_lambda_.1} parent=15 // pred_check
        %p142 = pneg %p78
      $region22: #{_lambda_.1} parent=15 // pred_check_branch
        %144 = sbr.rel (%p142) target = $region24
      $region23: #{_lambda_.1} parent=15 // pred_region
        %s145 = sadd.s32 %s15, %s16
        %p146 = scmp.lt.s32.totalorder %s145, 0
        %s147 = scalar_select %p146, %s145, 0
        %p148 = scmp.lt.s32.totalorder %s147, 0
        %s149 = scalar_select %p148, %s147, 0
        %s150 = smul.addr %s149, 8
        %s151 = scalar_lea.vmem %s1, %s150
        %s152 = sadd.s32 %s15, %s16
        %p153 = scmp.lt.s32.totalorder %s152, 0
        %s154 = scalar_select %p153, %s152, 0
      $region24: #{_lambda_.1} parent=15 // pred_fallthru
        _
    $region16: #{_lambda_.1} parent=5 // pred_fallthru
      _
    %p155 = scmp.le.s32.totalorder 1, %s8
    %p156 = scmp.lt.s32.totalorder %s8, 3
    %p157 = pnand %p155, %p156
    %p158 = pneg %p157
    // Predicated region
    $region25: #{_lambda_.1} parent=5 // pred_check
      _
    $region26: #{_lambda_.1} parent=5 // pred_check_branch
      %160 = sbr.rel (%p157) target = $region28
    $region27: #{_lambda_.1} parent=5 // pred_region
      %s161 = ssub.s32 %s8, 1
      %s162 = sadd.s32 %s17, %s18
      %p163 = scmp.lt.s32.totalorder %s162, 0
      %s164 = scalar_select %p163, %s162, 0
      %p165 = scmp.lt.s32.totalorder %s164, 0
      %s166 = scalar_select %p165, %s164, 0
      %s167 = smul.addr %s166, 8
      %s168 = scalar_lea.vmem %s0, %s167
      %p169 = pneg %p52
      %p170 = pneg %p49
      %s171 = sadd.s32 %s17, %s18
      %p172 = scmp.lt.s32.totalorder %s171, 0
      %s173 = scalar_select %p172, %s171, 0
      %p174 = scmp.lt.s32.totalorder %s173, 0
      %s175 = scalar_select %p174, %s173, 0
      %s176 = smul.addr %s175, 8
      %s177 = scalar_lea.vmem %s1, %s176
      %p178 = pneg %p84
      %p179 = pneg %p81
      %p180 = pneg %p110
      %p181 = pneg %p107
      %p182 = scmp.lt.s32.totalorder %s17, 1
      %s183 = scalar_select %p182, %s17, 1
      %s184 = smul.addr %s183, 8
      %s185 = scalar_lea.vmem %s2, %s184
      %s186 = sadd.s32 %s17, %s18
      %p187 = scmp.lt.s32.totalorder %s186, 0
      %s188 = scalar_select %p187, %s186, 0
      %p189 = scmp.lt.s32.totalorder %s188, 0
      %s190 = scalar_select %p189, %s188, 0
      %s191 = smul.addr %s190, 8
      %s192 = scalar_lea.vmem %s0, %s191
      %s193 = sadd.s32 %s17, %s18
      %p194 = scmp.lt.s32.totalorder %s193, 0
      %s195 = scalar_select %p194, %s193, 0
      %s196 = sadd.s32 %s17, %s18
      %p197 = scmp.lt.s32.totalorder %s196, 0
      %s198 = scalar_select %p197, %s196, 0
      %p199 = scmp.lt.s32.totalorder %s198, 0
      %s200 = scalar_select %p199, %s198, 0
      %s201 = smul.addr %s200, 8
      %s202 = scalar_lea.vmem %s1, %s201
      %s203 = sadd.s32 %s17, %s18
      %p204 = scmp.lt.s32.totalorder %s203, 0
      %s205 = scalar_select %p204, %s203, 0
      %p206 = scmp.lt.s32.totalorder %s17, 1
      %s207 = scalar_select %p206, %s17, 1
      %s208 = smul.addr %s207, 8
      %s209 = scalar_lea.vmem %s2, %s208
      %p210 = scmp.eq.s32.totalorder %s18, 0
      // Predicated region
      $region29: #{_lambda_.1} parent=27 // pred_check
        %p211 = pneg %p210
      $region30: #{_lambda_.1} parent=27 // pred_check_branch
        %213 = sbr.rel (%p211) target = $region32
      $region31: #{_lambda_.1} parent=27 // pred_region
        %214 = vst [vmem:[#allocation2] sm:$0xff] 0.0
      $region32: #{_lambda_.1} parent=27 // pred_fallthru
        _
      %v215 = vld [vmem:[%s192] sm:$0xff]
      %s216 = scalar_lea.vmem %s192, 8
      %v217 = vld [vmem:[%s216] sm:$0xff]
      %s218 = scalar_lea.vmem %s192, 16
      %v219 = vld [vmem:[%s218] sm:$0xff]
      %v220 = vmax.f32 %v215, %v217
      %v221 = vmax.f32 %v220, %v219
      %v222 = vsub.f32 %v215, %v221
      %v223 = vsub.f32 %v217, %v221
      %v224 = vsub.f32 %v219, %v221
      %v225 = vmul.f32 %v222, 1.442695
      %v226 = vpow.pop %v225
      %v227 = vmul.f32 %v223, 1.442695
      %v228 = vpow.pop %v227
      %v229 = vmul.f32 %v224, 1.442695
      %v230 = vpow.pop %v229
      %v231 = vadd.f32 %v226, %v228
      %v232 = vadd.f32 %v231, %v230
      %v233 = vlog2.pop %v232
      %v234 = vmul.f32 %v233, 0.6931472
      %v235 = vsub.f32 %v222, %v234
      %v236 = vsub.f32 %v223, %v234
      %v237 = vsub.f32 %v224, %v234
      %v238 = vld [vmem:[%s202] sm:$0xff]
      %vm239 = vcmp.eq.s32.totalorder %v238, 1
      %v240 = vsel %vm239, %v236, %v237
      %v241 = vsel %vm239, 0.3, 0.5
      %vm242 = vcmp.eq.s32.totalorder %v238, 0
      %v243 = vsel %vm242, %v235, %v240
      %v244 = vsel %vm242, 0.2, %v241
      %v245 = vmul.f32 %v243, 1.442695
      %v246 = vpow.pop %v245
      %v247 = vsub.f32 1.0, %v246
      %v248 = vmul.f32 %v247, %v247
      %v249 = vmul.f32 %v244, %v248
      %v250 = vsub.f32 0.0, %v243
      %v251 = vmul.f32 %v249, %v250
      %s252 = sadd.s32 %s17, %s18
      %s253 = smul.u32 %s252, 8
      %s254 = sadd.s32 %s253, 8
      %s255 = smul.u32 %s254, 128
      %p256 = scmp.gt.s32.totalorder %s255, 8
      %p257 = scmp.le.s32.totalorder %s255, 8
      // Predicated region
      $region33: #{_lambda_.1} parent=27 // pred_check
        %p258 = pneg %p257
      $region34: #{_lambda_.1} parent=27 // pred_check_branch
        %260 = sbr.rel (%p258) target = $region36
      $region35: #{_lambda_.1} parent=27 // pred_region
        %v261 = vld [vmem:[#allocation2] sm:$0xff]
        %v262 = vadd.f32 %v251, 0.0
        %v263 = vadd.f32 %v261, %v262
        %264 = vst [vmem:[#allocation2] sm:$0xff] %v263
      $region36: #{_lambda_.1} parent=27 // pred_fallthru
        _
      // Predicated region
      $region37: #{_lambda_.1} parent=27 // pred_check
        %p265 = pneg %p256
      $region38: #{_lambda_.1} parent=27 // pred_check_branch
        %267 = sbr.rel (%p265) target = $region40
      $region39: #{_lambda_.1} parent=27 // pred_region
        %v268 = vlaneseq
        %v269 = vshrl.u32 %v268, 7
        %v270 = vlaneseq
        %v271 = vand.u32 %v270, 127
        %v272 = vstv %s253
        %v273 = vadd.s32 %v272, %v269
        %v274 = vmul.u32 %v273, 128
        %v275 = vadd.s32 %v274, %v271
        %vm276 = vcmp.lt.s32.totalorder %v275, 8
        %v277 = vsel %vm276, %v251, 0.0
        %v278 = vld [vmem:[#allocation2] sm:$0xff]
        %v279 = vadd.f32 %v277, 0.0
        %v280 = vadd.f32 %v278, %v279
        %281 = vst [vmem:[#allocation2] sm:$0xff] %v280
      $region40: #{_lambda_.1} parent=27 // pred_fallthru
        _
      // Predicated region
      $region41: #{_lambda_.1} parent=27 // pred_check
        %p282 = pneg %p210
      $region42: #{_lambda_.1} parent=27 // pred_check_branch
        %284 = sbr.rel (%p282) target = $region44
      $region43: #{_lambda_.1} parent=27 // pred_region
        %v285 = vld [vmem:[#allocation2] sm:$0xff]
        %286 = vst [vmem:[%s209] sm:$0xff] %v285
      $region44: #{_lambda_.1} parent=27 // pred_fallthru
        _
      %p287 = scmp.lt.s32.totalorder %s17, 1
      %s288 = scalar_select %p287, %s17, 1
      %s289 = smul.addr %s288, 8
      %s290 = scalar_lea.vmem %s2, %s289
      // Predicated region
      $region45: #{_lambda_.1} parent=27 // pred_check
        %p291 = pneg %p107
      $region46: #{_lambda_.1} parent=27 // pred_check_branch
        %293 = sbr.rel (%p291) target = $region48
      $region47: #{_lambda_.1} parent=27 // pred_region
        _
      $region48: #{_lambda_.1} parent=27 // pred_fallthru
        _
    $region28: #{_lambda_.1} parent=5 // pred_fallthru
      _
    %p294 = scmp.le.s32.totalorder 2, %s8
    // Predicated region
    $region49: #{_lambda_.1} parent=5 // pred_check
      %p295 = pneg %p294
    $region50: #{_lambda_.1} parent=5 // pred_check_branch
      %297 = sbr.rel (%p295) target = $region52
    $region51: #{_lambda_.1} parent=5 // pred_region
      %s298 = ssub.s32 %s8, 2
      // Predicated region
      $region53: #{_lambda_.1} parent=51 // pred_check
        %p299 = pneg %p113
      $region54: #{_lambda_.1} parent=51 // pred_check_branch
        %301 = sbr.rel (%p299) target = $region56
      $region55: #{_lambda_.1} parent=51 // pred_region
        %p302 = scmp.lt.s32.totalorder %s19, 1
        %s303 = scalar_select %p302, %s19, 1
        %s304 = smul.addr %s303, 8
        %s305 = scalar_lea.vmem %s2, %s304
      $region56: #{_lambda_.1} parent=51 // pred_fallthru
        _
    $region52: #{_lambda_.1} parent=5 // pred_fallthru
      _
  $region6: #{_lambda_.1} parent=0 // loop_footer
    %s12 = sadd.s32 1, %s8
  $region7: #{_lambda_.1} parent=0 // loop_footer_branch
    %7 = sbr.rel target = $region3
  $region8: #{_lambda_.1} parent=0 // loop_exit
    _

</llo_original>
